<compile_context>
chip_gen: v5e
topology: v5e:2x2
jax: 0.10.0
libtpu: 0.0.40
codegen_flags: <defaults>
</compile_context>

<pallas_src>
import numpy as np
import jax
import jax.numpy as jnp
from jax.experimental import pallas as pl
from jax.experimental.pallas import tpu as pltpu


def make_positional_embeddings(n_pos: int, dim: int) -> jnp.ndarray:
    """Deterministic sinusoidal table, identical to the PyTorch __init__."""
    position_enc = np.array(
        [[pos / np.power(10000, 2 * (j // 2) / dim) for j in range(dim)]
         for pos in range(n_pos)],
        dtype=np.float64,
    )
    emb = np.zeros((n_pos, dim), dtype=np.float32)
    emb[:, 0::2] = np.sin(position_enc[:, 0::2]).astype(np.float32)
    emb[:, 1::2] = np.cos(position_enc[:, 1::2]).astype(np.float32)
    return jnp.asarray(emb)


def _round_up(x: int, m: int) -> int:
    return ((x + m - 1) // m) * m


def _pick_tb(n: int, tb_max: int) -> int:
    """Row-block size: prefer one that divides n exactly (=> no padded rows and
    the trailing slice is a no-op); 512/256 first for the 256-wide MXU."""
    for cand in (512, 256, 128, 64, 32, 16, 8):
        if cand <= tb_max and n % cand == 0:
            return cand
    tb = min(tb_max, _round_up(n, 8))
    return max(8, (tb // 8) * 8)


def _split_bf16x3(emb_f32: jnp.ndarray) -> jnp.ndarray:
    """Split f32 into 3 bf16 chunks with hi + mid + lo == emb exactly."""
    hi = emb_f32.astype(jnp.bfloat16)
    r1 = emb_f32 - hi.astype(jnp.float32)            # exact (Sterbenz)
    mid = r1.astype(jnp.bfloat16)
    r2 = r1 - mid.astype(jnp.float32)                # exact
    lo = r2.astype(jnp.bfloat16)                     # exact (<= 8 bits left)
    return jnp.stack([hi, mid, lo], axis=0)          # (3, n_pos, dim) bf16


# ----------------------------------------------------------------------------
# Path A: small tables -> one-hot gather on the MXU (3 exact bf16 passes).
# ----------------------------------------------------------------------------

def _onehot_gather_kernel(pos_ref, emb_ref, out_ref):
    # pos_ref: VMEM int32[tb, 1]            block of flattened, clamped positions
    # emb_ref: VMEM bf16[3, n_pos, dim_p]   hi/mid/lo table chunks (grid-invariant)
    # out_ref: VMEM f32[tb, dim_p]
    tb = out_ref.shape[0]
    n_pos = emb_ref.shape[1]

    pos = pos_ref[...]                                           # (tb, 1)
    col = jax.lax.broadcasted_iota(jnp.int32, (tb, n_pos), 1)    # int compare
    onehot = (col == pos).astype(jnp.bfloat16)                   # exact 0/1

    # Three DEFAULT-precision MXU passes, f32 accumulation.  Exact: the one-hot
    # selects a single row of each chunk and hi+mid+lo reconstructs the f32 row.
    acc = jnp.dot(onehot, emb_ref[0], preferred_element_type=jnp.float32)
    acc = acc + jnp.dot(onehot, emb_ref[1], preferred_element_type=jnp.float32)
    acc = acc + jnp.dot(onehot, emb_ref[2], preferred_element_type=jnp.float32)
    out_ref[...] = acc


def _onehot_path(pos_flat, emb_f32, n, n_pos, dim, dim_pad, tb_max):
    if dim_pad != dim:
        emb_f32 = jnp.pad(emb_f32, ((0, 0), (0, dim_pad - dim)))
    emb3 = _split_bf16x3(emb_f32)                     # (3, n_pos, dim_pad) bf16

    tb = _pick_tb(n, tb_max)
    n_pad = _round_up(n, tb)
    if n_pad != n:
        pos_flat = jnp.pad(pos_flat, (0, n_pad - n))  # pad with valid index 0
    pos2d = pos_flat.reshape(n_pad, 1)

    # VMEM budget from the actual need, capped by device capacity (v7x: 64 MiB).
    need = (2 * 3 * n_pos * dim_pad * 2      # double-buffered bf16 table chunks
            + 2 * tb * dim_pad * 4           # output double buffer
            + 2 * tb * 4                     # position blocks
            + tb * n_pos * 2                 # bf16 one-hot temporary
            + tb * dim_pad * 4)              # f32 accumulator temporary
    try:
        vmem_cap = int(pltpu.get_tpu_info().vmem_capacity_bytes)
    except Exception:
        vmem_cap = 64 << 20
    vmem_limit = int(min(max(need + (4 << 20), 16 << 20), (vmem_cap * 3) // 4))

    out = pl.pallas_call(
        _onehot_gather_kernel,
        out_shape=jax.ShapeDtypeStruct((n_pad, dim_pad), jnp.float32),
        grid_spec=pltpu.PrefetchScalarGridSpec(
            num_scalar_prefetch=0,
            grid=(n_pad // tb,),
            in_specs=[
                # positions: one (tb, 1) block per grid step
                pl.BlockSpec((tb, 1), lambda i: (i, 0)),
                # table chunks: grid-invariant block (pipeline elides re-DMA)
                pl.BlockSpec((3, n_pos, dim_pad), lambda i: (0, 0, 0)),
            ],
            out_specs=pl.BlockSpec((tb, dim_pad), lambda i: (i, 0)),
        ),
        compiler_params=pltpu.CompilerParams(
            dimension_semantics=("parallel",),
            vmem_limit_bytes=vmem_limit,
        ),
    )(pos2d, emb3)
    return out, n_pad


# ----------------------------------------------------------------------------
# Path B: large tables -> table stays in HBM, per-row DMA gather.
# ----------------------------------------------------------------------------

_NBUF = 8   # row DMAs kept in flight (power of two)


def _dma_gather_kernel(pos_ref, emb_hbm, out_ref, stage_ref, sem_ref):
    # pos_ref  : SMEM int32[n_pad]     all flattened, clamped positions (prefetched)
    # emb_hbm  : HBM  f32[n_pos, dim]  full table, never copied wholesale to VMEM
    # out_ref  : VMEM f32[tb, dim]     one dense output block
    # stage_ref: VMEM f32[tb, dim]     staging buffer filled by per-row DMAs
    # sem_ref  : DMA semaphores, shape (_NBUF,)
    tb = out_ref.shape[0]
    base = pl.program_id(0) * tb

    def start_row(r):
        idx = pos_ref[base + r]
        pltpu.make_async_copy(emb_hbm.at[pl.ds(idx, 1)],
                              stage_ref.at[pl.ds(r, 1)],
                              sem_ref.at[r & (_NBUF - 1)]).start()

    def wait_row(r):
        # Same-sized descriptor; the source index is irrelevant for the wait.
        pltpu.make_async_copy(emb_hbm.at[pl.ds(0, 1)],
                              stage_ref.at[pl.ds(r, 1)],
                              sem_ref.at[r & (_NBUF - 1)]).wait()

    # Prime up to _NBUF row DMAs.
    @pl.loop(0, min(_NBUF, tb))
    def _(r):
        start_row(r)

    # Steady state: wait the oldest in-flight row, reuse its semaphore slot.
    if tb > _NBUF:
        @pl.loop(_NBUF, tb)
        def _(r):
            wait_row(r - _NBUF)
            start_row(r)

    # Drain the tail.
    @pl.loop(max(tb - _NBUF, 0), tb)
    def _(r):
        wait_row(r)

    out_ref[...] = stage_ref[...]


def _dma_path(pos_flat, emb_f32, n, n_pos, dim, tb_max):
    tb = _pick_tb(n, min(tb_max, 256))       # bound the staging buffer size
    n_pad = _round_up(n, tb)
    if n_pad != n:
        pos_flat = jnp.pad(pos_flat, (0, n_pad - n))  # pad with valid index 0

    out = pl.pallas_call(
        _dma_gather_kernel,
        out_shape=jax.ShapeDtypeStruct((n_pad, dim), jnp.float32),
        grid_spec=pltpu.PrefetchScalarGridSpec(
            num_scalar_prefetch=1,                        # positions -> SMEM
            grid=(n_pad // tb,),
            in_specs=[pl.BlockSpec(memory_space=pl.ANY)],  # table stays in HBM
            out_specs=pl.BlockSpec((tb, dim), lambda i, pos: (i, 0)),
            scratch_shapes=[
                pltpu.VMEM((tb, dim), jnp.float32),
                pltpu.SemaphoreType.DMA((_NBUF,)),
            ],
        ),
        compiler_params=pltpu.CompilerParams(
            dimension_semantics=("parallel",),
        ),
    )(pos_flat, emb_f32)
    return out, n_pad


# ----------------------------------------------------------------------------
# Public wrapper (the nn.Module forward).
# ----------------------------------------------------------------------------

def positional_embedding(positions: jnp.ndarray, embeddings: jnp.ndarray, *,
                         tb_max: int = 512,
                         onehot_max_n_pos: int = 512,
                         onehot_max_table_bytes: int = 24 << 20) -> jnp.ndarray:
    """positions: int array of any shape; returns positions.shape + (dim,)."""
    n_pos, dim = embeddings.shape
    orig_shape = positions.shape

    pos_flat = positions.reshape(-1).astype(jnp.int32)
    n = int(pos_flat.shape[0])

    # Clamp indices: OOB VMEM/HBM reads are not runtime-checked on TPU.
    # TODO(synk): PyTorch raises on out-of-range indices; we clamp instead.
    pos_flat = jnp.clip(pos_flat, 0, n_pos - 1)

    emb_f32 = embeddings.astype(jnp.float32)

    # Lane-dense only when needed: skip padding (and the output round trip)
    # when dim is already a multiple of 128 (the common case).
    dim_pad = dim if dim % 128 == 0 else _round_up(dim, 128)

    table_vmem_bytes = 2 * 3 * n_pos * dim_pad * 2   # double-buffered bf16 x 3
    use_onehot = (n_pos <= onehot_max_n_pos
                  and table_vmem_bytes <= onehot_max_table_bytes)

    if use_onehot:
        out_padded, _ = _onehot_path(pos_flat, emb_f32, n, n_pos, dim, dim_pad, tb_max)
        out = out_padded[:n, :dim]        # no-op when n_pad == n and dim_pad == dim
    else:
        out_padded, _ = _dma_path(pos_flat, emb_f32, n, n_pos, dim, tb_max)
        out = out_padded[:n]              # no-op when n_pad == n

    # TODO(synk): PyTorch named-tensor refine_names('...', 'char_emb') is pure
    # metadata with no JAX equivalent; it is dropped here.
    return out.reshape(orig_shape + (dim,))


if __name__ == "__main__":
    # Shapes implied by the module: small sinusoidal table, (batch, seq) positions.
    n_pos, dim = 16, 32
    batch, seq = 2, 8
    emb = make_positional_embeddings(n_pos, dim)

    key = jax.random.PRNGKey(0)
    positions = jax.random.randint(key, (batch, seq), 0, n_pos, dtype=jnp.int32)
    ref = np.asarray(emb)[np.asarray(positions)]

    # 1) Small-table path (one-hot MXU gather, exact bf16x3 split).
    out1 = jax.block_until_ready(positional_embedding(positions, emb))
    assert out1.shape == (batch, seq, dim)
    np.testing.assert_allclose(np.asarray(out1), ref, rtol=0, atol=1e-6)

    # 2) Same data, forcing the large-table path (HBM row-DMA gather).
    out2 = jax.block_until_ready(
        positional_embedding(positions, emb, onehot_max_n_pos=0))
    np.testing.assert_allclose(np.asarray(out2), ref, rtol=0, atol=0)

    # 3) One-hot path with a multi-step grid (n = 48 -> tb = 16, 3 steps).
    pos3 = jax.random.randint(jax.random.PRNGKey(1), (2, 24), 0, n_pos,
                              dtype=jnp.int32)
    out3 = jax.block_until_ready(positional_embedding(pos3, emb))
    ref3 = np.asarray(emb)[np.asarray(pos3)]
    np.testing.assert_allclose(np.asarray(out3), ref3, rtol=0, atol=1e-6)

    # 4) Larger table that auto-selects the DMA path, multi-step grid,
    #    dim already 128-aligned (no padding round trip).
    n_pos4, dim4 = 544, 128
    emb4 = make_positional_embeddings(n_pos4, dim4)
    pos4 = jax.random.randint(jax.random.PRNGKey(2), (3, 40), 0, n_pos4,
                              dtype=jnp.int32)
    out4 = jax.block_until_ready(positional_embedding(pos4, emb4))
    ref4 = np.asarray(emb4)[np.asarray(pos4)]
    np.testing.assert_allclose(np.asarray(out4), ref4, rtol=0, atol=0)

    print("KERNEL_OK")
</pallas_src>

<mosaic_0001>
module attributes {stable_mosaic.version = 11 : i64} {
  func.func @_onehot_gather_kernel(%arg0: i32, %arg1: memref<16x1xi32, #tpu.memory_space<vmem>>, %arg2: memref<3x16x128xbf16, #tpu.memory_space<vmem>>, %arg3: memref<16x128xf32, #tpu.memory_space<vmem>>) attributes {dimension_semantics = [#tpu.dimension_semantics<parallel>], iteration_bounds = array<i64: 1>, scalar_prefetch = 0 : i64, scratch_operands = 0 : i64, tpu.core_type = #tpu.core_type<tc>, window_params = [{transform_indices = @transform_0, window_bounds = array<i64: 16, 1>}, {pipeline_mode = #tpu.pipeline_mode<synchronous>, transform_indices = @transform_1, window_bounds = array<i64: 3, 16, 128>}, {transform_indices = @transform_2, window_bounds = array<i64: 16, 128>}]} {
    %c0 = arith.constant 0 : index
    %c0_0 = arith.constant 0 : index
    %0 = vector.load %arg1[%c0, %c0_0] : memref<16x1xi32, #tpu.memory_space<vmem>>, vector<16x1xi32>
    %1 = tpu.iota {dimensions = array<i32: 1>} : vector<16x16xi32>
    %2 = vector.broadcast %0 : vector<16x1xi32> to vector<16x16xi32>
    %3 = arith.cmpi eq, %1, %2 : vector<16x16xi32>
    %4 = arith.extui %3 : vector<16x16xi1> to vector<16x16xi32>
    %5 = arith.sitofp %4 : vector<16x16xi32> to vector<16x16xf32>
    %6 = arith.truncf %5 : vector<16x16xf32> to vector<16x16xbf16>
    %c0_1 = arith.constant 0 : index
    %c0_2 = arith.constant 0 : index
    %c0_3 = arith.constant 0 : index
    %7 = vector.load %arg2[%c0_1, %c0_2, %c0_3] : memref<3x16x128xbf16, #tpu.memory_space<vmem>>, vector<1x16x128xbf16>
    %8 = vector.shape_cast %7 : vector<1x16x128xbf16> to vector<16x128xbf16>
    %cst = arith.constant dense<0.000000e+00> : vector<16x128xf32>
    %9 = tpu.matmul %6, %8, %cst {dimension_numbers = #tpu.dot_dimension_numbers<[1], [0], [0], [1], [0, 0, 1, 1], [], []>} : vector<16x16xbf16>, vector<16x128xbf16>, vector<16x128xf32> -> vector<16x128xf32>
    %c1 = arith.constant 1 : index
    %c0_4 = arith.constant 0 : index
    %c0_5 = arith.constant 0 : index
    %10 = vector.load %arg2[%c1, %c0_4, %c0_5] : memref<3x16x128xbf16, #tpu.memory_space<vmem>>, vector<1x16x128xbf16>
    %11 = vector.shape_cast %10 : vector<1x16x128xbf16> to vector<16x128xbf16>
    %cst_6 = arith.constant dense<0.000000e+00> : vector<16x128xf32>
    %12 = tpu.matmul %6, %11, %cst_6 {dimension_numbers = #tpu.dot_dimension_numbers<[1], [0], [0], [1], [0, 0, 1, 1], [], []>} : vector<16x16xbf16>, vector<16x128xbf16>, vector<16x128xf32> -> vector<16x128xf32>
    %13 = arith.addf %9, %12 : vector<16x128xf32>
    %c2 = arith.constant 2 : index
    %c0_7 = arith.constant 0 : index
    %c0_8 = arith.constant 0 : index
    %14 = vector.load %arg2[%c2, %c0_7, %c0_8] : memref<3x16x128xbf16, #tpu.memory_space<vmem>>, vector<1x16x128xbf16>
    %15 = vector.shape_cast %14 : vector<1x16x128xbf16> to vector<16x128xbf16>
    %cst_9 = arith.constant dense<0.000000e+00> : vector<16x128xf32>
    %16 = tpu.matmul %6, %15, %cst_9 {dimension_numbers = #tpu.dot_dimension_numbers<[1], [0], [0], [1], [0, 0, 1, 1], [], []>} : vector<16x16xbf16>, vector<16x128xbf16>, vector<16x128xf32> -> vector<16x128xf32>
    %17 = arith.addf %13, %16 : vector<16x128xf32>
    %c0_10 = arith.constant 0 : index
    %c0_11 = arith.constant 0 : index
    %18 = vector.load %arg3[%c0_10, %c0_11] : memref<16x128xf32, #tpu.memory_space<vmem>>, vector<16x128xf32>
    tpu.vector_store %arg3[%c0_10, %c0_11], %17 {strides = array<i32>} : memref<16x128xf32, #tpu.memory_space<vmem>>, vector<16x128xf32>,
    return
  }
  func.func @transform_0(%arg0: i32) -> (i32, i32) {
    %c0_i32 = arith.constant 0 : i32
    %c0_i32_0 = arith.constant 0 : i32
    return %arg0, %c0_i32 : i32, i32
  }
  func.func @transform_1(%arg0: i32) -> (i32, i32, i32) {
    %c0_i32 = arith.constant 0 : i32
    %c0_i32_0 = arith.constant 0 : i32
    %c0_i32_1 = arith.constant 0 : i32
    %c0_i32_2 = arith.constant 0 : i32
    return %c0_i32, %c0_i32_0, %c0_i32_1 : i32, i32, i32
  }
  func.func @transform_2(%arg0: i32) -> (i32, i32) {
    %c0_i32 = arith.constant 0 : i32
    %c0_i32_0 = arith.constant 0 : i32
    return %arg0, %c0_i32 : i32, i32
  }
}

</mosaic_0001>

<llo_original>
// kernel: tpu_custom_call.1
$region0: #{tpu_custom_call.1}
  #allocation0 [shape = 'u32[]', space=smem, size = 0x4, offset = 0x4, fixed_abs, tag = 'smem constant byte address 0x4 - core index']
  #allocation1 [shape = 'u32[72,128]{1,0:T(1,128)}', space=vmem, size = 0x9000, scoped, tag = 'internal scratch']
  %s0 = inlined_call_operand.vmem [shape: s32[16,1], index: 0, kind: input, shape index: {}]
  %s1 = inlined_call_operand.hbm [shape: bf16[3,16,128], index: 1, kind: input, shape index: {}]
  %s2 = inlined_call_operand.hbm [shape: f32[16,128], index: 2, kind: output, shape index: {}]
  %s3 = sld [smem:[#allocation0]]
  $region22: #{tpu_custom_call.1} parent=0
    _
  %s5 = ssub.s32 1, %s3
  %s6 = scalar_select 0, %s5, %s3
  $region1: #{tpu_custom_call.1} parent=0
    #allocation2 [shape = 'u8[12288]{0}', space=vmem, size = 0x3000, scoped, tag = 'input window, operand 1, single buffered']
    #allocation3 [shape = 's32[1]{0}', space=sflag, size = 0x4, scoped, tag = 'scoped memory for tpu_custom_call.1']
    #allocation4 [shape = 's32[1]{0}', space=sflag, size = 0x4, scoped, tag = 'scoped memory for tpu_custom_call.1']
    #allocation5 [shape = 'u8[8192]{0}', space=vmem, size = 0x2000, scoped, tag = 'output window, operand 0, single buffered']
    %7 = vsyncpa [#allocation3], 0
    %8 = vsyncpa [#allocation4], 0
    // Predicated region
    $region2: #{tpu_custom_call.1} parent=1 // pred_check
      _
    $region3: #{tpu_custom_call.1} parent=1 // pred_check_branch
      %10 = sbr.rel (0) target = $region5
    $region4: #{tpu_custom_call.1} parent=1 // pred_region
      _
    $region5: #{tpu_custom_call.1} parent=1 // pred_fallthru
      _
    // Predicated region
    $region6: #{tpu_custom_call.1} parent=1 // pred_check
      _
    $region7: #{tpu_custom_call.1} parent=1 // pred_check_branch
      %12 = sbr.rel (0) target = $region9
    $region8: #{tpu_custom_call.1} parent=1 // pred_region
      %14 = vsyncadd [#allocation3], 0
      %s15 = sshll.u32 %s1, 4
      %s16 = int_to_ptr.hbm [resolvable:$true] %s15
      %s17 = sshll.u32 [#allocation2], 4
      %s18 = int_to_ptr.vmem [resolvable:$true] %s17
      %23 = dma.hbm_to_vmem [thread:$0]  %s16, 384, %s18, [#allocation3], 64, 64, 4
    $region9: #{tpu_custom_call.1} parent=1 // pred_fallthru
      _
    // Predicated region
    $region10: #{tpu_custom_call.1} parent=1 // pred_check
      _
    $region11: #{tpu_custom_call.1} parent=1 // pred_check_branch
      %25 = sbr.rel (0) target = $region13
    $region12: #{tpu_custom_call.1} parent=1 // pred_region
      %27 = dma.done [#allocation3], 384
    $region13: #{tpu_custom_call.1} parent=1 // pred_fallthru
      _
    %v29 = vld [vmem:[%s0] sm:$0xff]
    %v30 = vld [vmem:[%s0 + $0x8] sm:$0xff]
    %v31 = vlaneseq
    %v32 = vand.u32 %v31, 127
    %33 = vset.pattern.permute.xlu0 0
    %34 = vperm.xlu0 %33, %v29
    %v35 = vpop.permute.xlu0 %34
    %36 = vset.pattern.permute.xlu0 0
    %37 = vperm.xlu0 %36, %v30
    %v38 = vpop.permute.xlu0 %37
    %vm39 = vcmp.eq.s32.totalorder %v32, %v35
    %vm40 = vcmp.eq.s32.totalorder %v32, %v38
    %v41 = vsel %vm39, 1, 0
    %v42 = vsel %vm40, 1, 0
    %v43 = vcvt.s32.f32 %v41
    %v44 = vcvt.s32.f32 %v42
    %v45 = vpack.c.bf16 %v44, %v43
    %v46 = vld [vmem:[#allocation2] sm:$0xf]
    %v47 = vld [vmem:[#allocation2 + $0x4] sm:$0xf]
    %s48 = scalar_lea.vmem [#allocation2], 8
    %v49 = vld [vmem:[%s48] sm:$0xf]
    %v50 = vld [vmem:[%s48 + $0x4] sm:$0xf]
    %v53 = vunpack.c.l.b16 %v49
    %v54 = vunpack.c.l.b16 %v50
    %v55 = vpack.c.b16 %v54, %v53
    %vm57 = vcmask 130048
    %v59 = vsel %vm57, %v45, 0
    %61 = vmatpush.bf16.msra.mxu0 0
    %62 = vmatpush.bf16.msra.mxu0 0
    %63 = vmatpush.bf16.msra.mxu0 0
    %64 = vmatpush.bf16.msra.mxu0 0
    %65 = vmatpush.bf16.msra.mxu0 0
    %66 = vmatpush.bf16.msra.mxu0 0
    %67 = vmatpush.bf16.msra.mxu0 0
    %68 = vmatpush.bf16.msra.mxu0 %v55
    %69 = vmatmul.bf16.gmra.mxu0 %v59
    %v70 = vpop.f32.mrf.mxu0
    %v71 = vadd.f32 0.0, %v70
    %v72 = vpop.f32.mrf.mxu0
    %v73 = vadd.f32 0.0, %v72
    %74 = vdwg.mxu0
    %v77 = vunpack.c.l.b16 %v46
    %v78 = vunpack.c.l.b16 %v47
    %v79 = vpack.c.b16 %v78, %v77
    %81 = vmatpush.bf16.msra.mxu0 0
    %82 = vmatpush.bf16.msra.mxu0 0
    %83 = vmatpush.bf16.msra.mxu0 0
    %84 = vmatpush.bf16.msra.mxu0 0
    %85 = vmatpush.bf16.msra.mxu0 0
    %86 = vmatpush.bf16.msra.mxu0 0
    %87 = vmatpush.bf16.msra.mxu0 0
    %88 = vmatpush.bf16.msra.mxu0 %v79
    %89 = vmatmul.bf16.gmra.mxu0 %v59
    %v90 = vpop.f32.mrf.mxu0
    %v91 = vadd.f32 %v71, %v90
    %v92 = vpop.f32.mrf.mxu0
    %v93 = vadd.f32 %v73, %v92
    %94 = vdwg.mxu0
    %s95 = scalar_lea.vmem [#allocation2], 16
    %v96 = vld [vmem:[%s95] sm:$0xf]
    %v97 = vld [vmem:[%s95 + $0x4] sm:$0xf]
    %v100 = vunpack.c.l.b16 %v96
    %v101 = vunpack.c.l.b16 %v97
    %v102 = vpack.c.b16 %v101, %v100
    %104 = vmatpush.bf16.msra.mxu0 0
    %105 = vmatpush.bf16.msra.mxu0 0
    %106 = vmatpush.bf16.msra.mxu0 0
    %107 = vmatpush.bf16.msra.mxu0 0
    %108 = vmatpush.bf16.msra.mxu0 0
    %109 = vmatpush.bf16.msra.mxu0 0
    %110 = vmatpush.bf16.msra.mxu0 0
    %111 = vmatpush.bf16.msra.mxu0 %v102
    %112 = vmatmul.bf16.gmra.mxu0 %v59
    %v113 = vpop.f32.mrf.mxu0
    %v114 = vadd.f32 0.0, %v113
    %v115 = vpop.f32.mrf.mxu0
    %v116 = vadd.f32 0.0, %v115
    %117 = vdwg.mxu0
    %v118 = vadd.f32 %v91, %v114
    %v119 = vadd.f32 %v93, %v116
    %120 = vst [vmem:[#allocation5] sm:$0xff] %v118
    %121 = vst [vmem:[#allocation5 + $0x8] sm:$0xff] %v119
    // Predicated region
    $region14: #{tpu_custom_call.1} parent=1 // pred_check
      _
    $region15: #{tpu_custom_call.1} parent=1 // pred_check_branch
      %123 = sbr.rel (0) target = $region17
    $region16: #{tpu_custom_call.1} parent=1 // pred_region
      %125 = vsyncadd [#allocation4], 0
      %s126 = sshll.u32 [#allocation5], 4
      %s127 = int_to_ptr.vmem [resolvable:$true] %s126
      %s128 = sshll.u32 %s2, 4
      %s129 = int_to_ptr.hbm [resolvable:$true] %s128
      %134 = dma.vmem_to_hbm [thread:$0]  %s127, 256, %s129, [#allocation4], 128, 128, 8
    $region17: #{tpu_custom_call.1} parent=1 // pred_fallthru
      _
    // Predicated region
    $region18: #{tpu_custom_call.1} parent=1 // pred_check
      _
    $region19: #{tpu_custom_call.1} parent=1 // pred_check_branch
      %136 = sbr.rel (0) target = $region21
    $region20: #{tpu_custom_call.1} parent=1 // pred_region
      %138 = dma.done [#allocation4], 256
    $region21: #{tpu_custom_call.1} parent=1 // pred_fallthru
      _
    %139 = vsyncpa [#allocation3], 1
    %140 = vsyncpa [#allocation4], 1

</llo_original>
